<compile_context>
chip_gen: v7x
topology: tpu7x:2x2x1
jax: 0.10.0
libtpu: 0.0.40
codegen_flags: <defaults>
</compile_context>

<pallas_src>
from functools import partial

import jax
import jax.numpy as jnp
from jax.experimental import pallas as pl
from jax.experimental.pallas import tpu as pltpu

SEG = 128          # one lane-block per layer segment
N_BLOCKS = 8       # e1, e2, mu, ls, d1_q, d1_z, d2, out


def _ceil(a, m):
    return (a + m - 1) // m * m


def _elu(x):
    # F.elu(alpha=1.0); exp only sees non-positive inputs (no inf risk).
    return jnp.where(x > 0, x, jnp.exp(jnp.minimum(x, 0.0)) - 1.0)


def vae_arx_kernel(data_ref, p_ref, y_ref, kl_ref, *, input_dim, output_dim,
                   latent_dim, layer_dim, regressor_dim, bias_row, q_pad):
    # ---- lane-block-aligned parameter views (zero-cost static slices) ----
    def w(blk, fan_in, fan_out):
        return p_ref[:fan_in, blk * SEG:blk * SEG + fan_out]

    def b(blk, fan_out):
        return p_ref[bias_row:bias_row + 1, blk * SEG:blk * SEG + fan_out]

    # ---- lane-block-aligned activation views ----
    x   = data_ref[:, 0:input_dim]                       # encoder input
    q8  = data_ref[:, SEG:SEG + q_pad]                   # regressor (zero-padded)
    eps = data_ref[:, 2 * SEG:2 * SEG + latent_dim]      # reparam noise

    # ---- encoder ----
    h = _elu(jnp.dot(x, w(0, input_dim, layer_dim),
                     preferred_element_type=jnp.float32) + b(0, layer_dim))
    h = _elu(jnp.dot(h, w(1, layer_dim, layer_dim),
                     preferred_element_type=jnp.float32) + b(1, layer_dim))
    mu = jnp.dot(h, w(2, layer_dim, latent_dim),
                 preferred_element_type=jnp.float32) + b(2, latent_dim)
    log_sigma = jnp.dot(h, w(3, layer_dim, latent_dim),
                        preferred_element_type=jnp.float32) + b(3, latent_dim)
    sigma = jnp.exp(log_sigma)
    z = mu + sigma * eps

    # ---- KL divergence (target_sigma = 0.1); sigma*sigma == exp(2*log_sigma) ----
    inv_ts2 = jnp.float32(100.0)                 # 1 / 0.1**2
    two_log_ts = jnp.float32(2.0) * jnp.log(jnp.float32(0.1))
    term = (inv_ts2 * mu * mu
            + inv_ts2 * (sigma * sigma)
            - 2.0 * log_sigma
            + two_log_ts)
    kl_ref[0, 0] = 0.5 * (jnp.mean(term) - jnp.float32(latent_dim))

    # ---- decoder: split-weight dec1 (no lane-axis concat of q and z) ----
    d = _elu(jnp.dot(q8, w(4, q_pad, layer_dim),
                     preferred_element_type=jnp.float32)
             + jnp.dot(z, w(5, latent_dim, layer_dim),
                       preferred_element_type=jnp.float32)
             + b(4, layer_dim))
    d = _elu(jnp.dot(d, w(6, layer_dim, layer_dim),
                     preferred_element_type=jnp.float32) + b(6, layer_dim))
    # out-block is a full 128-lane segment (zero-padded cols) -> unmasked store.
    y_ref[...] = jnp.dot(d, w(7, layer_dim, SEG),
                         preferred_element_type=jnp.float32) + b(7, SEG)


# ---------------------------------------------------------------------------
# Parameter / activation packing
# ---------------------------------------------------------------------------

def init_params(key, input_dim, output_dim, latent_dim, layer_dim, regressor_dim):
    """Deterministic PyTorch-Linear-like init; weights stored as [in, out]."""
    def linear(key, fan_in, fan_out):
        kw, kb = jax.random.split(key)
        bound = 1.0 / jnp.sqrt(jnp.float32(fan_in))
        w = jax.random.uniform(kw, (fan_in, fan_out), jnp.float32, -bound, bound)
        b = jax.random.uniform(kb, (1, fan_out), jnp.float32, -bound, bound)
        return w, b

    ks = jax.random.split(key, 6)
    p = {}
    p["w_e1"], p["b_e1"] = linear(ks[0], input_dim, layer_dim)
    p["w_e2"], p["b_e2"] = linear(ks[1], layer_dim, layer_dim)
    p["w_lat"], p["b_lat"] = linear(ks[2], layer_dim, 2 * latent_dim)
    # dec1 acts on cat(q, z): first regressor_dim rows map to q, rest to z.
    p["w_d1"], p["b_d1"] = linear(ks[3], latent_dim + regressor_dim, layer_dim)
    p["w_d2"], p["b_d2"] = linear(ks[4], layer_dim, layer_dim)
    p["w_o"], p["b_o"] = linear(ks[5], layer_dim, output_dim)
    return p


def _slab_rows(input_dim, latent_dim, layer_dim, regressor_dim):
    wrows = _ceil(max(input_dim, layer_dim, latent_dim, regressor_dim), 8)
    return wrows, wrows + 8   # (bias_row, total_rows)


def pack_params(p, *, input_dim, output_dim, latent_dim, layer_dim, regressor_dim):
    """Pack all Linear layers into one (rows, 8*128) slab, one 128-lane block
    per layer, weight in rows [0, fan_in), bias in row `bias_row`."""
    assert layer_dim <= SEG and output_dim <= SEG and 2 * latent_dim <= SEG
    bias_row, rows = _slab_rows(input_dim, latent_dim, layer_dim, regressor_dim)
    P = jnp.zeros((rows, N_BLOCKS * SEG), jnp.float32)

    def put(P, blk, w, bias):
        fan_in, fan_out = w.shape
        P = P.at[:fan_in, blk * SEG:blk * SEG + fan_out].set(w)
        P = P.at[bias_row, blk * SEG:blk * SEG + fan_out].set(bias.reshape(-1))
        return P

    w_mu, w_ls = p["w_lat"][:, :latent_dim], p["w_lat"][:, latent_dim:]
    b_mu, b_ls = p["b_lat"][:, :latent_dim], p["b_lat"][:, latent_dim:]
    w_d1q = p["w_d1"][:regressor_dim, :]
    w_d1z = p["w_d1"][regressor_dim:, :]

    P = put(P, 0, p["w_e1"], p["b_e1"])
    P = put(P, 1, p["w_e2"], p["b_e2"])
    P = put(P, 2, w_mu, b_mu)
    P = put(P, 3, w_ls, b_ls)
    P = put(P, 4, w_d1q, p["b_d1"])                       # dec1 bias added here once
    P = put(P, 5, w_d1z, jnp.zeros_like(p["b_d1"]))       # (unused bias slot)
    P = put(P, 6, p["w_d2"], p["b_d2"])
    P = put(P, 7, p["w_o"], p["b_o"])
    return P


def pack_data(obs, eps, *, input_dim, regressor_dim, latent_dim):
    """One (B, 3*128) activation slab: [x|0][q|0][eps|0]."""
    assert input_dim <= SEG and regressor_dim <= SEG and latent_dim <= SEG

    def seg(a):
        return jnp.pad(a, ((0, 0), (0, SEG - a.shape[1])))

    x = obs[:, :input_dim]
    q = obs[:, input_dim:input_dim + regressor_dim]
    return jnp.concatenate([seg(x), seg(q), seg(eps)], axis=1).astype(jnp.float32)


# ---------------------------------------------------------------------------
# Forward wrapper
# ---------------------------------------------------------------------------

def vae_arx_forward(obs, eps, params, *, input_dim, output_dim,
                    latent_dim, layer_dim, regressor_dim):
    B = obs.shape[0]
    bias_row, _ = _slab_rows(input_dim, latent_dim, layer_dim, regressor_dim)
    q_pad = _ceil(regressor_dim, 8)

    data = pack_data(obs, eps, input_dim=input_dim,
                     regressor_dim=regressor_dim, latent_dim=latent_dim)
    P = pack_params(params, input_dim=input_dim, output_dim=output_dim,
                    latent_dim=latent_dim, layer_dim=layer_dim,
                    regressor_dim=regressor_dim)

    vmem = pl.BlockSpec(memory_space=pltpu.MemorySpace.VMEM)
    smem = pl.BlockSpec(memory_space=pltpu.MemorySpace.SMEM)

    flops = 2 * B * (input_dim * layer_dim + layer_dim * layer_dim
                     + 2 * layer_dim * latent_dim
                     + q_pad * layer_dim + latent_dim * layer_dim
                     + layer_dim * layer_dim + layer_dim * SEG)
    transcendentals = B * (4 * layer_dim + latent_dim)
    bytes_accessed = int(data.size * 4 + P.size * 4 + B * SEG * 4 + 4)

    y_pad, kl = pl.pallas_call(
        partial(vae_arx_kernel, input_dim=input_dim, output_dim=output_dim,
                latent_dim=latent_dim, layer_dim=layer_dim,
                regressor_dim=regressor_dim, bias_row=bias_row, q_pad=q_pad),
        out_shape=(jax.ShapeDtypeStruct((B, SEG), jnp.float32),   # lane-dense y
                   jax.ShapeDtypeStruct((1, 1), jnp.float32)),    # KL scalar
        in_specs=[vmem, vmem],
        out_specs=(vmem, smem),
        cost_estimate=pl.CostEstimate(flops=flops,
                                      transcendentals=transcendentals,
                                      bytes_accessed=bytes_accessed),
    )(data, P)
    return y_pad[:, :output_dim], kl[0, 0]


# ---------------------------------------------------------------------------
# Pure-JAX reference (mirrors the PyTorch forward)
# ---------------------------------------------------------------------------

def reference_forward(obs, eps, params, *, input_dim, latent_dim, regressor_dim):
    def elu(x):
        return jnp.where(x > 0, x, jnp.exp(jnp.minimum(x, 0.0)) - 1.0)

    obs_x = obs[:, :input_dim]
    q = obs[:, input_dim:]
    h = elu(obs_x @ params["w_e1"] + params["b_e1"])
    h = elu(h @ params["w_e2"] + params["b_e2"])
    r = h @ params["w_lat"] + params["b_lat"]
    mu = r[:, :latent_dim]
    ls = r[:, latent_dim:]
    z = mu + jnp.exp(ls) * eps
    ts = 0.1
    term = (mu ** 2 / ts ** 2 + jnp.exp(2 * ls) / ts ** 2
            - 2 * ls + 2 * jnp.log(jnp.float32(ts)))
    kl = 0.5 * (jnp.mean(term) - latent_dim)
    d = elu(jnp.concatenate([q, z], axis=1) @ params["w_d1"] + params["b_d1"])
    d = elu(d @ params["w_d2"] + params["b_d2"])
    y = d @ params["w_o"] + params["b_o"]
    return y, kl


if __name__ == "__main__":
    # Small shapes consistent with the module.
    B = 8
    input_dim = 16
    output_dim = 4
    latent_dim = 8
    layer_dim = 32
    regressor_dim = 4

    key = jax.random.PRNGKey(0)
    k_params, k_obs, k_eps = jax.random.split(key, 3)

    params = init_params(k_params, input_dim, output_dim, latent_dim,
                         layer_dim, regressor_dim)
    # obs carries [encoder input | regressor] columns, width input+regressor.
    obs = jax.random.normal(k_obs, (B, input_dim + regressor_dim), jnp.float32)
    # eps = torch.randn(B, latent_dim) in the module; passed explicitly for determinism.
    eps = jax.random.normal(k_eps, (B, latent_dim), jnp.float32)

    y, kl = vae_arx_forward(obs, eps, params,
                            input_dim=input_dim, output_dim=output_dim,
                            latent_dim=latent_dim, layer_dim=layer_dim,
                            regressor_dim=regressor_dim)
    jax.block_until_ready((y, kl))

    y_ref, kl_ref = reference_forward(obs, eps, params,
                                      input_dim=input_dim,
                                      latent_dim=latent_dim,
                                      regressor_dim=regressor_dim)
    assert y.shape == (B, output_dim)
    assert jnp.allclose(y, y_ref, atol=1e-4, rtol=1e-4)
    assert jnp.allclose(kl, kl_ref, atol=1e-4, rtol=1e-4)

    print("KERNEL_OK")
</pallas_src>

<mosaic_0001>
module attributes {stable_mosaic.version = 11 : i64} {
  func.func @vae_arx_kernel(%arg0: memref<8x384xf32, #tpu.memory_space<vmem>>, %arg1: memref<40x1024xf32, #tpu.memory_space<vmem>>, %arg2: memref<8x128xf32, #tpu.memory_space<vmem>>, %arg3: memref<1x1xf32, #tpu.memory_space<smem>>) attributes {dimension_semantics = [], scalar_prefetch = 0 : i64, scratch_operands = 0 : i64, tpu.core_type = #tpu.core_type<tc>} {
    %c0 = arith.constant 0 : index
    %c0_0 = arith.constant 0 : index
    %0 = vector.load %arg0[%c0, %c0_0] : memref<8x384xf32, #tpu.memory_space<vmem>>, vector<8x16xf32>
    %c0_1 = arith.constant 0 : index
    %c128 = arith.constant 128 : index
    %1 = vector.load %arg0[%c0_1, %c128] : memref<8x384xf32, #tpu.memory_space<vmem>>, vector<8x8xf32>
    %c0_2 = arith.constant 0 : index
    %c256 = arith.constant 256 : index
    %2 = vector.load %arg0[%c0_2, %c256] : memref<8x384xf32, #tpu.memory_space<vmem>>, vector<8x8xf32>
    %c0_3 = arith.constant 0 : index
    %c0_4 = arith.constant 0 : index
    %3 = vector.load %arg1[%c0_3, %c0_4] : memref<40x1024xf32, #tpu.memory_space<vmem>>, vector<16x32xf32>
    %cst = arith.constant dense<0.000000e+00> : vector<8x32xf32>
    %4 = tpu.matmul %0, %3, %cst {dimension_numbers = #tpu.dot_dimension_numbers<[1], [0], [0], [1], [0, 0, 1, 1], [], []>} : vector<8x16xf32>, vector<16x32xf32>, vector<8x32xf32> -> vector<8x32xf32>
    %c32 = arith.constant 32 : index
    %c0_5 = arith.constant 0 : index
    %5 = vector.load %arg1[%c32, %c0_5] : memref<40x1024xf32, #tpu.memory_space<vmem>>, vector<1x32xf32>
    %6 = vector.broadcast %5 : vector<1x32xf32> to vector<8x32xf32>
    %7 = arith.addf %4, %6 : vector<8x32xf32>
    %cst_6 = arith.constant 0.000000e+00 : f32
    %8 = vector.broadcast %cst_6 : f32 to vector<8x32xf32>
    %9 = arith.cmpf ogt, %7, %8 : vector<8x32xf32>
    %cst_7 = arith.constant 0.000000e+00 : f32
    %10 = vector.broadcast %cst_7 : f32 to vector<8x32xf32>
    %11 = arith.minimumf %7, %10 : vector<8x32xf32>
    %12 = math.exp %11 : vector<8x32xf32>
    %cst_8 = arith.constant 1.000000e+00 : f32
    %13 = vector.broadcast %cst_8 : f32 to vector<8x32xf32>
    %14 = arith.subf %12, %13 : vector<8x32xf32>
    %15 = arith.select %9, %7, %14 : vector<8x32xi1>, vector<8x32xf32>
    %c0_9 = arith.constant 0 : index
    %c128_10 = arith.constant 128 : index
    %16 = vector.load %arg1[%c0_9, %c128_10] : memref<40x1024xf32, #tpu.memory_space<vmem>>, vector<32x32xf32>
    %cst_11 = arith.constant dense<0.000000e+00> : vector<8x32xf32>
    %17 = tpu.matmul %15, %16, %cst_11 {dimension_numbers = #tpu.dot_dimension_numbers<[1], [0], [0], [1], [0, 0, 1, 1], [], []>} : vector<8x32xf32>, vector<32x32xf32>, vector<8x32xf32> -> vector<8x32xf32>
    %c32_12 = arith.constant 32 : index
    %c128_13 = arith.constant 128 : index
    %18 = vector.load %arg1[%c32_12, %c128_13] : memref<40x1024xf32, #tpu.memory_space<vmem>>, vector<1x32xf32>
    %19 = vector.broadcast %18 : vector<1x32xf32> to vector<8x32xf32>
    %20 = arith.addf %17, %19 : vector<8x32xf32>
    %cst_14 = arith.constant 0.000000e+00 : f32
    %21 = vector.broadcast %cst_14 : f32 to vector<8x32xf32>
    %22 = arith.cmpf ogt, %20, %21 : vector<8x32xf32>
    %cst_15 = arith.constant 0.000000e+00 : f32
    %23 = vector.broadcast %cst_15 : f32 to vector<8x32xf32>
    %24 = arith.minimumf %20, %23 : vector<8x32xf32>
    %25 = math.exp %24 : vector<8x32xf32>
    %cst_16 = arith.constant 1.000000e+00 : f32
    %26 = vector.broadcast %cst_16 : f32 to vector<8x32xf32>
    %27 = arith.subf %25, %26 : vector<8x32xf32>
    %28 = arith.select %22, %20, %27 : vector<8x32xi1>, vector<8x32xf32>
    %c0_17 = arith.constant 0 : index
    %c256_18 = arith.constant 256 : index
    %29 = vector.load %arg1[%c0_17, %c256_18] : memref<40x1024xf32, #tpu.memory_space<vmem>>, vector<32x8xf32>
    %cst_19 = arith.constant dense<0.000000e+00> : vector<8x8xf32>
    %30 = tpu.matmul %28, %29, %cst_19 {dimension_numbers = #tpu.dot_dimension_numbers<[1], [0], [0], [1], [0, 0, 1, 1], [], []>} : vector<8x32xf32>, vector<32x8xf32>, vector<8x8xf32> -> vector<8x8xf32>
    %c32_20 = arith.constant 32 : index
    %c256_21 = arith.constant 256 : index
    %31 = vector.load %arg1[%c32_20, %c256_21] : memref<40x1024xf32, #tpu.memory_space<vmem>>, vector<1x8xf32>
    %32 = vector.broadcast %31 : vector<1x8xf32> to vector<8x8xf32>
    %33 = arith.addf %30, %32 : vector<8x8xf32>
    %c0_22 = arith.constant 0 : index
    %c384 = arith.constant 384 : index
    %34 = vector.load %arg1[%c0_22, %c384] : memref<40x1024xf32, #tpu.memory_space<vmem>>, vector<32x8xf32>
    %cst_23 = arith.constant dense<0.000000e+00> : vector<8x8xf32>
    %35 = tpu.matmul %28, %34, %cst_23 {dimension_numbers = #tpu.dot_dimension_numbers<[1], [0], [0], [1], [0, 0, 1, 1], [], []>} : vector<8x32xf32>, vector<32x8xf32>, vector<8x8xf32> -> vector<8x8xf32>
    %c32_24 = arith.constant 32 : index
    %c384_25 = arith.constant 384 : index
    %36 = vector.load %arg1[%c32_24, %c384_25] : memref<40x1024xf32, #tpu.memory_space<vmem>>, vector<1x8xf32>
    %37 = vector.broadcast %36 : vector<1x8xf32> to vector<8x8xf32>
    %38 = arith.addf %35, %37 : vector<8x8xf32>
    %39 = math.exp %38 : vector<8x8xf32>
    %40 = arith.mulf %39, %2 : vector<8x8xf32>
    %41 = arith.addf %33, %40 : vector<8x8xf32>
    %cst_26 = arith.constant 1.000000e-01 : f32
    %42 = math.log %cst_26 : f32
    %cst_27 = arith.constant 2.000000e+00 : f32
    %43 = arith.mulf %cst_27, %42 : f32
    %cst_28 = arith.constant 1.000000e+02 : f32
    %44 = vector.broadcast %cst_28 : f32 to vector<8x8xf32>
    %45 = arith.mulf %44, %33 : vector<8x8xf32>
    %46 = arith.mulf %45, %33 : vector<8x8xf32>
    %47 = arith.mulf %39, %39 : vector<8x8xf32>
    %cst_29 = arith.constant 1.000000e+02 : f32
    %48 = vector.broadcast %cst_29 : f32 to vector<8x8xf32>
    %49 = arith.mulf %48, %47 : vector<8x8xf32>
    %50 = arith.addf %46, %49 : vector<8x8xf32>
    %cst_30 = arith.constant 2.000000e+00 : f32
    %51 = vector.broadcast %cst_30 : f32 to vector<8x8xf32>
    %52 = arith.mulf %51, %38 : vector<8x8xf32>
    %53 = arith.subf %50, %52 : vector<8x8xf32>
    %54 = vector.broadcast %43 : f32 to vector<8x8xf32>
    %55 = arith.addf %53, %54 : vector<8x8xf32>
    %56 = vector.shape_cast %55 : vector<8x8xf32> to vector<1x8x8xf32>
    %cst_31 = arith.constant dense<0.000000e+00> : vector<1xf32>
    %57 = vector.multi_reduction <add>, %56, %cst_31 [1, 2] : vector<1x8x8xf32> to vector<1xf32>
    %58 = vector.shape_cast %57 : vector<1xf32> to vector<1x1x1xf32>
    %59 = vector.extract %58[0, 0, 0] : f32 from vector<1x1x1xf32>
    %cst_32 = arith.constant 6.400000e+01 : f32
    %60 = arith.divf %59, %cst_32 : f32
    %cst_33 = arith.constant 8.000000e+00 : f32
    %61 = arith.subf %60, %cst_33 : f32
    %cst_34 = arith.constant 5.000000e-01 : f32
    %62 = arith.mulf %cst_34, %61 : f32
    %c0_35 = arith.constant 0 : index
    %c0_36 = arith.constant 0 : index
    %63 = memref.load %arg3[%c0_35, %c0_36] : memref<1x1xf32, #tpu.memory_space<smem>>
    memref.store %62, %arg3[%c0_35, %c0_36] : memref<1x1xf32, #tpu.memory_space<smem>>
    %c0_37 = arith.constant 0 : index
    %c512 = arith.constant 512 : index
    %64 = vector.load %arg1[%c0_37, %c512] : memref<40x1024xf32, #tpu.memory_space<vmem>>, vector<8x32xf32>
    %cst_38 = arith.constant dense<0.000000e+00> : vector<8x32xf32>
    %65 = tpu.matmul %1, %64, %cst_38 {dimension_numbers = #tpu.dot_dimension_numbers<[1], [0], [0], [1], [0, 0, 1, 1], [], []>} : vector<8x8xf32>, vector<8x32xf32>, vector<8x32xf32> -> vector<8x32xf32>
    %c0_39 = arith.constant 0 : index
    %c640 = arith.constant 640 : index
    %66 = vector.load %arg1[%c0_39, %c640] : memref<40x1024xf32, #tpu.memory_space<vmem>>, vector<8x32xf32>
    %cst_40 = arith.constant dense<0.000000e+00> : vector<8x32xf32>
    %67 = tpu.matmul %41, %66, %cst_40 {dimension_numbers = #tpu.dot_dimension_numbers<[1], [0], [0], [1], [0, 0, 1, 1], [], []>} : vector<8x8xf32>, vector<8x32xf32>, vector<8x32xf32> -> vector<8x32xf32>
    %68 = arith.addf %65, %67 : vector<8x32xf32>
    %c32_41 = arith.constant 32 : index
    %c512_42 = arith.constant 512 : index
    %69 = vector.load %arg1[%c32_41, %c512_42] : memref<40x1024xf32, #tpu.memory_space<vmem>>, vector<1x32xf32>
    %70 = vector.broadcast %69 : vector<1x32xf32> to vector<8x32xf32>
    %71 = arith.addf %68, %70 : vector<8x32xf32>
    %cst_43 = arith.constant 0.000000e+00 : f32
    %72 = vector.broadcast %cst_43 : f32 to vector<8x32xf32>
    %73 = arith.cmpf ogt, %71, %72 : vector<8x32xf32>
    %cst_44 = arith.constant 0.000000e+00 : f32
    %74 = vector.broadcast %cst_44 : f32 to vector<8x32xf32>
    %75 = arith.minimumf %71, %74 : vector<8x32xf32>
    %76 = math.exp %75 : vector<8x32xf32>
    %cst_45 = arith.constant 1.000000e+00 : f32
    %77 = vector.broadcast %cst_45 : f32 to vector<8x32xf32>
    %78 = arith.subf %76, %77 : vector<8x32xf32>
    %79 = arith.select %73, %71, %78 : vector<8x32xi1>, vector<8x32xf32>
    %c0_46 = arith.constant 0 : index
    %c768 = arith.constant 768 : index
    %80 = vector.load %arg1[%c0_46, %c768] : memref<40x1024xf32, #tpu.memory_space<vmem>>, vector<32x32xf32>
    %cst_47 = arith.constant dense<0.000000e+00> : vector<8x32xf32>
    %81 = tpu.matmul %79, %80, %cst_47 {dimension_numbers = #tpu.dot_dimension_numbers<[1], [0], [0], [1], [0, 0, 1, 1], [], []>} : vector<8x32xf32>, vector<32x32xf32>, vector<8x32xf32> -> vector<8x32xf32>
    %c32_48 = arith.constant 32 : index
    %c768_49 = arith.constant 768 : index
    %82 = vector.load %arg1[%c32_48, %c768_49] : memref<40x1024xf32, #tpu.memory_space<vmem>>, vector<1x32xf32>
    %83 = vector.broadcast %82 : vector<1x32xf32> to vector<8x32xf32>
    %84 = arith.addf %81, %83 : vector<8x32xf32>
    %cst_50 = arith.constant 0.000000e+00 : f32
    %85 = vector.broadcast %cst_50 : f32 to vector<8x32xf32>
    %86 = arith.cmpf ogt, %84, %85 : vector<8x32xf32>
    %cst_51 = arith.constant 0.000000e+00 : f32
    %87 = vector.broadcast %cst_51 : f32 to vector<8x32xf32>
    %88 = arith.minimumf %84, %87 : vector<8x32xf32>
    %89 = math.exp %88 : vector<8x32xf32>
    %cst_52 = arith.constant 1.000000e+00 : f32
    %90 = vector.broadcast %cst_52 : f32 to vector<8x32xf32>
    %91 = arith.subf %89, %90 : vector<8x32xf32>
    %92 = arith.select %86, %84, %91 : vector<8x32xi1>, vector<8x32xf32>
    %c0_53 = arith.constant 0 : index
    %c896 = arith.constant 896 : index
    %93 = vector.load %arg1[%c0_53, %c896] : memref<40x1024xf32, #tpu.memory_space<vmem>>, vector<32x128xf32>
    %cst_54 = arith.constant dense<0.000000e+00> : vector<8x128xf32>
    %94 = tpu.matmul %92, %93, %cst_54 {dimension_numbers = #tpu.dot_dimension_numbers<[1], [0], [0], [1], [0, 0, 1, 1], [], []>} : vector<8x32xf32>, vector<32x128xf32>, vector<8x128xf32> -> vector<8x128xf32>
    %c32_55 = arith.constant 32 : index
    %c896_56 = arith.constant 896 : index
    %95 = vector.load %arg1[%c32_55, %c896_56] : memref<40x1024xf32, #tpu.memory_space<vmem>>, vector<1x128xf32>
    %96 = vector.broadcast %95 : vector<1x128xf32> to vector<8x128xf32>
    %97 = arith.addf %94, %96 : vector<8x128xf32>
    %c0_57 = arith.constant 0 : index
    %c0_58 = arith.constant 0 : index
    %98 = vector.load %arg2[%c0_57, %c0_58] : memref<8x128xf32, #tpu.memory_space<vmem>>, vector<8x128xf32>
    tpu.vector_store %arg2[%c0_57, %c0_58], %97 {strides = array<i32>} : memref<8x128xf32, #tpu.memory_space<vmem>>, vector<8x128xf32>,
    return
  }
}

</mosaic_0001>

<llo_original>
// kernel: tpu_custom_call.1
$region0: #{tpu_custom_call.1}
  #allocation0 [shape = 'u32[]', space=smem, size = 0x4, offset = 0x4, fixed_abs, tag = 'smem constant byte address 0x4 - core index']
  #allocation1 [shape = 'u32[144,128]{1,0:T(1,128)}', space=vmem, size = 0x12000, scoped, tag = 'internal scratch']
  %s0 = inlined_call_operand.hbm [shape: f32[8,384], index: 0, kind: input, shape index: {}]
  %s1 = inlined_call_operand.hbm [shape: f32[40,1024], index: 1, kind: input, shape index: {}]
  %s2 = inlined_call_operand.hbm [shape: f32[8,128], index: 2, kind: output, shape index: {0}]
  %s3 = inlined_call_operand.hbm [shape: f32[1,1], index: 3, kind: output, shape index: {1}]
  %4 = xla_tuple %s2, %s3
  %s5 = sld [smem:[#allocation0]]
  $region34: #{tpu_custom_call.1} parent=0
    _
  %s7 = ssub.s32 1, %s5
  %s8 = scalar_select 0, %s7, %s5
  $region1: #{tpu_custom_call.1} parent=0
    #allocation2 [shape = 'u8[12288]{0}', space=vmem, size = 0x3000, scoped, tag = 'input window, operand 0, single buffered']
    #allocation3 [shape = 's32[1]{0}', space=sflag, size = 0x4, scoped, tag = 'scoped memory for tpu_custom_call.1']
    #allocation4 [shape = 's32[1]{0}', space=sflag, size = 0x4, scoped, tag = 'scoped memory for tpu_custom_call.1']
    #allocation5 [shape = 's32[1]{0}', space=sflag, size = 0x4, scoped, tag = 'scoped memory for tpu_custom_call.1']
    #allocation6 [shape = 'u8[163840]{0}', space=vmem, size = 0x28000, scoped, tag = 'input window, operand 1, single buffered']
    #allocation7 [shape = 's32[1]{0}', space=sflag, size = 0x4, scoped, tag = 'scoped memory for tpu_custom_call.1']
    #allocation8 [shape = 'u8[4096]{0}', space=vmem, size = 0x1000, scoped, tag = 'output window, operand 0, single buffered']
    #allocation9 [shape = 'u8[512]{0}', space=smem, size = 0x200, scoped, tag = 'output window, operand 1, single buffered']
    %9 = vsyncpa [#allocation3], 0
    %10 = vsyncpa [#allocation7], 0
    %11 = vsyncpa [#allocation4], 0
    %12 = vsyncpa [#allocation5], 0
    // Predicated region
    $region2: #{tpu_custom_call.1} parent=1 // pred_check
      _
    $region3: #{tpu_custom_call.1} parent=1 // pred_check_branch
      %14 = sbr.rel (0) target = $region5
    $region4: #{tpu_custom_call.1} parent=1 // pred_region
      %s16 = ssub.s32 384, 384
      %17 = vsyncadd [#allocation3], %s16
      %s19 = sshll.u32 [#allocation2], 4
      %s20 = int_to_ptr.vmem [resolvable:$true] %s19
      %22 = dma.hbm_to_vmem [thread:$0]  %s0, 384, %s20, [#allocation3]
    $region5: #{tpu_custom_call.1} parent=1 // pred_fallthru
      _
    // Predicated region
    $region6: #{tpu_custom_call.1} parent=1 // pred_check
      _
    $region7: #{tpu_custom_call.1} parent=1 // pred_check_branch
      %24 = sbr.rel (0) target = $region9
    $region8: #{tpu_custom_call.1} parent=1 // pred_region
      %s26 = ssub.s32 5120, 5120
      %27 = vsyncadd [#allocation7], %s26
      %s28 = sshll.u32 [#allocation6], 4
      %s29 = int_to_ptr.vmem [resolvable:$true] %s28
      %34 = dma.hbm_to_vmem [thread:$0]  %s1, 5120, %s29, [#allocation7], 1024, 1024, 64
    $region9: #{tpu_custom_call.1} parent=1 // pred_fallthru
      _
    // Predicated region
    $region10: #{tpu_custom_call.1} parent=1 // pred_check
      _
    $region11: #{tpu_custom_call.1} parent=1 // pred_check_branch
      %36 = sbr.rel (0) target = $region13
    $region12: #{tpu_custom_call.1} parent=1 // pred_region
      %37 = dma.done [#allocation3], 384
    $region13: #{tpu_custom_call.1} parent=1 // pred_fallthru
      _
    // Predicated region
    $region14: #{tpu_custom_call.1} parent=1 // pred_check
      _
    $region15: #{tpu_custom_call.1} parent=1 // pred_check_branch
      %39 = sbr.rel (0) target = $region17
    $region16: #{tpu_custom_call.1} parent=1 // pred_region
      %40 = dma.done [#allocation7], 5120
    $region17: #{tpu_custom_call.1} parent=1 // pred_fallthru
      _
    %v41 = vld [vmem:[#allocation2] sm:$0xff]
    %v42 = vld [vmem:[#allocation2 + $0x8] sm:$0xff]
    %v43 = vld [vmem:[#allocation2 + $0x10] sm:$0xff]
    %v44 = vld [vmem:[#allocation6] sm:$0xff]
    %v45 = vld [vmem:[#allocation6 + $0x40] sm:$0xff]
    %v46 = vld [vmem:[#allocation6 + $0x100] ss:$0 sm:$0xff]
    %vm47 = vcmask 130048
    %v49 = vsel %vm47, %v41, 0
    %51 = vmatprep.subr.mxu0 0.0
    %52 = vmatpush1.msra.mxu0 %v44
    %53 = vmatprep.subr.mxu0 0.0
    %54 = vmatpush1.msra.mxu0 %v45
    %55 = vmatprep.subr.mxu0 0.0
    %56 = vmatpush1.msra.mxu0 0.0
    %57 = vmatprep.subr.mxu0 0.0
    %58 = vmatpush1.msra.mxu0 0.0
    %59 = vmatprep.subr.mxu0 0.0
    %60 = vmatpush1.msra.mxu0 0.0
    %61 = vmatprep.subr.mxu0 0.0
    %62 = vmatpush1.msra.mxu0 0.0
    %63 = vmatprep.subr.mxu0 0.0
    %64 = vmatpush1.msra.mxu0 0.0
    %65 = vmatprep.subr.mxu0 0.0
    %66 = vmatpush1.msra.mxu0 0.0
    %67 = vmatprep.subr.mxu0 0.0
    %68 = vmatpush1.msra.mxu0 0.0
    %69 = vmatprep.subr.mxu0 0.0
    %70 = vmatpush1.msra.mxu0 0.0
    %71 = vmatprep.subr.mxu0 0.0
    %72 = vmatpush1.msra.mxu0 0.0
    %73 = vmatprep.subr.mxu0 0.0
    %74 = vmatpush1.msra.mxu0 0.0
    %75 = vmatprep.subr.mxu0 0.0
    %76 = vmatpush1.msra.mxu0 0.0
    %77 = vmatprep.subr.mxu0 0.0
    %78 = vmatpush1.msra.mxu0 0.0
    %79 = vmatprep.subr.mxu0 0.0
    %80 = vmatpush1.msra.mxu0 0.0
    %81 = vmatprep.subr.mxu0 0.0
    %82 = vmatpush1.msra.mxu0 0.0
    %83 = vmatprep.subr.mxu0 0.0
    %84 = vmatpush1.msra.mxu0 0.0
    %85 = vmatprep.subr.mxu0 0.0
    %86 = vmatpush1.msra.mxu0 0.0
    %87 = vmatprep.subr.mxu0 0.0
    %88 = vmatpush1.msra.mxu0 0.0
    %89 = vmatprep.subr.mxu0 0.0
    %90 = vmatpush1.msra.mxu0 0.0
    %91 = vmatprep.subr.mxu0 0.0
    %92 = vmatpush1.msra.mxu0 0.0
    %93 = vmatprep.subr.mxu0 0.0
    %94 = vmatpush1.msra.mxu0 0.0
    %95 = vmatprep.subr.mxu0 0.0
    %96 = vmatpush1.msra.mxu0 0.0
    %97 = vmatprep.subr.mxu0 0.0
    %98 = vmatpush1.msra.mxu0 0.0
    %99 = vmatprep.subr.mxu0 0.0
    %100 = vmatpush1.msra.mxu0 0.0
    %101 = vmatprep.subr.mxu0 0.0
    %102 = vmatpush1.msra.mxu0 0.0
    %103 = vmatprep.subr.mxu0 0.0
    %104 = vmatpush1.msra.mxu0 0.0
    %105 = vmatprep.subr.mxu0 0.0
    %106 = vmatpush1.msra.mxu0 0.0
    %107 = vmatprep.subr.mxu0 0.0
    %108 = vmatpush1.msra.mxu0 0.0
    %109 = vmatprep.subr.mxu0 0.0
    %110 = vmatpush1.msra.mxu0 0.0
    %111 = vmatprep.subr.mxu0 0.0
    %112 = vmatpush1.msra.mxu0 0.0
    %113 = vmatprep.subr.mxu0 0.0
    %114 = vmatpush1.msra.mxu0 0.0
    %115 = vmatprep.mubr.f32.mxu0 0.0
    %116 = vmatmul.mubr.f32.gmra.mrb[0].mxu0 %v49
    %v117 = vpop.f32.mrb[0].mxu0
    %v118 = vadd.f32 %v46, %v117
    %v119 = vpop.f32.mrb[0].mxu0
    %120 = vdwg.mxu0
    %vm121 = vcmp.gt.f32.partialorder %v118, 0.0
    %v122 = vmin.f32 %v118, 0.0
    %v123 = vmul.f32 %v122, 1.442695
    %v124 = vpow.pop %v123
    %v125 = vsub.f32 %v124, 1.0
    %v126 = vsel %vm121, %v118, %v125
    %v127 = vld [vmem:[#allocation6 + $0x8] sm:$0xff]
    %v128 = vld [vmem:[#allocation6 + $0x48] sm:$0xff]
    %v129 = vld [vmem:[#allocation6 + $0x88] sm:$0xff]
    %v130 = vld [vmem:[#allocation6 + $0xc8] sm:$0xff]
    %v131 = vld [vmem:[#allocation6 + $0x108] ss:$0 sm:$0xff]
    %vm132 = vcmask 261120
    %v134 = vsel %vm132, %v126, 0
    %136 = vmatprep.subr.mxu0 0.0
    %137 = vmatpush1.msra.mxu0 %v127
    %138 = vmatprep.subr.mxu0 0.0
    %139 = vmatpush1.msra.mxu0 %v128
    %140 = vmatprep.subr.mxu0 0.0
    %141 = vmatpush1.msra.mxu0 %v129
    %142 = vmatprep.subr.mxu0 0.0
    %143 = vmatpush1.msra.mxu0 %v130
    %144 = vmatprep.subr.mxu0 0.0
    %145 = vmatpush1.msra.mxu0 0.0
    %146 = vmatprep.subr.mxu0 0.0
    %147 = vmatpush1.msra.mxu0 0.0
    %148 = vmatprep.subr.mxu0 0.0
    %149 = vmatpush1.msra.mxu0 0.0
    %150 = vmatprep.subr.mxu0 0.0
    %151 = vmatpush1.msra.mxu0 0.0
    %152 = vmatprep.subr.mxu0 0.0
    %153 = vmatpush1.msra.mxu0 0.0
    %154 = vmatprep.subr.mxu0 0.0
    %155 = vmatpush1.msra.mxu0 0.0
    %156 = vmatprep.subr.mxu0 0.0
    %157 = vmatpush1.msra.mxu0 0.0
    %158 = vmatprep.subr.mxu0 0.0
    %159 = vmatpush1.msra.mxu0 0.0
    %160 = vmatprep.subr.mxu0 0.0
    %161 = vmatpush1.msra.mxu0 0.0
    %162 = vmatprep.subr.mxu0 0.0
    %163 = vmatpush1.msra.mxu0 0.0
    %164 = vmatprep.subr.mxu0 0.0
    %165 = vmatpush1.msra.mxu0 0.0
    %166 = vmatprep.subr.mxu0 0.0
    %167 = vmatpush1.msra.mxu0 0.0
    %168 = vmatprep.subr.mxu0 0.0
    %169 = vmatpush1.msra.mxu0 0.0
    %170 = vmatprep.subr.mxu0 0.0
    %171 = vmatpush1.msra.mxu0 0.0
    %172 = vmatprep.subr.mxu0 0.0
    %173 = vmatpush1.msra.mxu0 0.0
    %174 = vmatprep.subr.mxu0 0.0
    %175 = vmatpush1.msra.mxu0 0.0
    %176 = vmatprep.subr.mxu0 0.0
    %177 = vmatpush1.msra.mxu0 0.0
    %178 = vmatprep.subr.mxu0 0.0
    %179 = vmatpush1.msra.mxu0 0.0
    %180 = vmatprep.subr.mxu0 0.0
    %181 = vmatpush1.msra.mxu0 0.0
    %182 = vmatprep.subr.mxu0 0.0
    %183 = vmatpush1.msra.mxu0 0.0
    %184 = vmatprep.subr.mxu0 0.0
    %185 = vmatpush1.msra.mxu0 0.0
    %186 = vmatprep.subr.mxu0 0.0
    %187 = vmatpush1.msra.mxu0 0.0
    %188 = vmatprep.subr.mxu0 0.0
    %189 = vmatpush1.msra.mxu0 0.0
    %190 = vmatprep.subr.mxu0 0.0
    %191 = vmatpush1.msra.mxu0 0.0
    %192 = vmatprep.subr.mxu0 0.0
    %193 = vmatpush1.msra.mxu0 0.0
    %194 = vmatprep.subr.mxu0 0.0
    %195 = vmatpush1.msra.mxu0 0.0
    %196 = vmatprep.subr.mxu0 0.0
    %197 = vmatpush1.msra.mxu0 0.0
    %198 = vmatprep.subr.mxu0 0.0
    %199 = vmatpush1.msra.mxu0 0.0
    %200 = vmatprep.mubr.f32.mxu0 0.0
    %201 = vmatmul.mubr.f32.gmra.mrb[0].mxu0 %v134
    %v202 = vpop.f32.mrb[0].mxu0
    %v203 = vadd.f32 %v131, %v202
    %v204 = vpop.f32.mrb[0].mxu0
    %205 = vdwg.mxu0
    %vm206 = vcmp.gt.f32.partialorder %v203, 0.0
    %v207 = vmin.f32 %v203, 0.0
    %v208 = vmul.f32 %v207, 1.442695
    %v209 = vpow.pop %v208
    %v210 = vsub.f32 %v209, 1.0
    %v211 = vsel %vm206, %v203, %v210
    %v212 = vld [vmem:[#allocation6 + $0x10] sm:$0xff]
    %v213 = vld [vmem:[#allocation6 + $0x50] sm:$0xff]
    %v214 = vld [vmem:[#allocation6 + $0x90] sm:$0xff]
    %v215 = vld [vmem:[#allocation6 + $0xd0] sm:$0xff]
    %v216 = vld [vmem:[#allocation6 + $0x110] ss:$0 sm:$0xff]
    %v218 = vsel %vm132, %v211, 0
    %220 = vmatprep.subr.mxu0 0.0
    %221 = vmatpush1.msra.mxu0 %v212
    %222 = vmatprep.subr.mxu0 0.0
    %223 = vmatpush1.msra.mxu0 %v213
    %224 = vmatprep.subr.mxu0 0.0
    %225 = vmatpush1.msra.mxu0 %v214
    %226 = vmatprep.subr.mxu0 0.0
    %227 = vmatpush1.msra.mxu0 %v215
    %228 = vmatprep.subr.mxu0 0.0
    %229 = vmatpush1.msra.mxu0 0.0
    %230 = vmatprep.subr.mxu0 0.0
    %231 = vmatpush1.msra.mxu0 0.0
    %232 = vmatprep.subr.mxu0 0.0
    %233 = vmatpush1.msra.mxu0 0.0
    %234 = vmatprep.subr.mxu0 0.0
    %235 = vmatpush1.msra.mxu0 0.0
    %236 = vmatprep.subr.mxu0 0.0
    %237 = vmatpush1.msra.mxu0 0.0
    %238 = vmatprep.subr.mxu0 0.0
    %239 = vmatpush1.msra.mxu0 0.0
    %240 = vmatprep.subr.mxu0 0.0
    %241 = vmatpush1.msra.mxu0 0.0
    %242 = vmatprep.subr.mxu0 0.0
    %243 = vmatpush1.msra.mxu0 0.0
    %244 = vmatprep.subr.mxu0 0.0
    %245 = vmatpush1.msra.mxu0 0.0
    %246 = vmatprep.subr.mxu0 0.0
    %247 = vmatpush1.msra.mxu0 0.0
    %248 = vmatprep.subr.mxu0 0.0
    %249 = vmatpush1.msra.mxu0 0.0
    %250 = vmatprep.subr.mxu0 0.0
    %251 = vmatpush1.msra.mxu0 0.0
    %252 = vmatprep.subr.mxu0 0.0
    %253 = vmatpush1.msra.mxu0 0.0
    %254 = vmatprep.subr.mxu0 0.0
    %255 = vmatpush1.msra.mxu0 0.0
    %256 = vmatprep.subr.mxu0 0.0
    %257 = vmatpush1.msra.mxu0 0.0
    %258 = vmatprep.subr.mxu0 0.0
    %259 = vmatpush1.msra.mxu0 0.0
    %260 = vmatprep.subr.mxu0 0.0
    %261 = vmatpush1.msra.mxu0 0.0
    %262 = vmatprep.subr.mxu0 0.0
    %263 = vmatpush1.msra.mxu0 0.0
    %264 = vmatprep.subr.mxu0 0.0
    %265 = vmatpush1.msra.mxu0 0.0
    %266 = vmatprep.subr.mxu0 0.0
    %267 = vmatpush1.msra.mxu0 0.0
    %268 = vmatprep.subr.mxu0 0.0
    %269 = vmatpush1.msra.mxu0 0.0
    %270 = vmatprep.subr.mxu0 0.0
    %271 = vmatpush1.msra.mxu0 0.0
    %272 = vmatprep.subr.mxu0 0.0
    %273 = vmatpush1.msra.mxu0 0.0
    %274 = vmatprep.subr.mxu0 0.0
    %275 = vmatpush1.msra.mxu0 0.0
    %276 = vmatprep.subr.mxu0 0.0
    %277 = vmatpush1.msra.mxu0 0.0
    %278 = vmatprep.subr.mxu0 0.0
    %279 = vmatpush1.msra.mxu0 0.0
    %280 = vmatprep.subr.mxu0 0.0
    %281 = vmatpush1.msra.mxu0 0.0
    %282 = vmatprep.subr.mxu0 0.0
    %283 = vmatpush1.msra.mxu0 0.0
    %284 = vmatprep.mubr.f32.mxu0 0.0
    %285 = vmatmul.mubr.f32.gmra.mrb[0].mxu0 %v218
    %v286 = vpop.f32.mrb[0].mxu0
    %v287 = vadd.f32 %v216, %v286
    %v288 = vpop.f32.mrb[0].mxu0
    %289 = vdwg.mxu0
    %v290 = vld [vmem:[#allocation6 + $0x18] sm:$0xff]
    %v291 = vld [vmem:[#allocation6 + $0x58] sm:$0xff]
    %v292 = vld [vmem:[#allocation6 + $0x98] sm:$0xff]
    %v293 = vld [vmem:[#allocation6 + $0xd8] sm:$0xff]
    %v294 = vld [vmem:[#allocation6 + $0x118] ss:$0 sm:$0xff]
    %295 = vmatprep.subr.mxu0 0.0
    %296 = vmatpush1.msra.mxu0 %v290
    %297 = vmatprep.subr.mxu0 0.0
    %298 = vmatpush1.msra.mxu0 %v291
    %299 = vmatprep.subr.mxu0 0.0
    %300 = vmatpush1.msra.mxu0 %v292
    %301 = vmatprep.subr.mxu0 0.0
    %302 = vmatpush1.msra.mxu0 %v293
    %303 = vmatprep.subr.mxu0 0.0
    %304 = vmatpush1.msra.mxu0 0.0
    %305 = vmatprep.subr.mxu0 0.0
    %306 = vmatpush1.msra.mxu0 0.0
    %307 = vmatprep.subr.mxu0 0.0
    %308 = vmatpush1.msra.mxu0 0.0
    %309 = vmatprep.subr.mxu0 0.0
    %310 = vmatpush1.msra.mxu0 0.0
    %311 = vmatprep.subr.mxu0 0.0
    %312 = vmatpush1.msra.mxu0 0.0
    %313 = vmatprep.subr.mxu0 0.0
    %314 = vmatpush1.msra.mxu0 0.0
    %315 = vmatprep.subr.mxu0 0.0
    %316 = vmatpush1.msra.mxu0 0.0
    %317 = vmatprep.subr.mxu0 0.0
    %318 = vmatpush1.msra.mxu0 0.0
    %319 = vmatprep.subr.mxu0 0.0
    %320 = vmatpush1.msra.mxu0 0.0
    %321 = vmatprep.subr.mxu0 0.0
    %322 = vmatpush1.msra.mxu0 0.0
    %323 = vmatprep.subr.mxu0 0.0
    %324 = vmatpush1.msra.mxu0 0.0
    %325 = vmatprep.subr.mxu0 0.0
    %326 = vmatpush1.msra.mxu0 0.0
    %327 = vmatprep.subr.mxu0 0.0
    %328 = vmatpush1.msra.mxu0 0.0
    %329 = vmatprep.subr.mxu0 0.0
    %330 = vmatpush1.msra.mxu0 0.0
    %331 = vmatprep.subr.mxu0 0.0
    %332 = vmatpush1.msra.mxu0 0.0
    %333 = vmatprep.subr.mxu0 0.0
    %334 = vmatpush1.msra.mxu0 0.0
    %335 = vmatprep.subr.mxu0 0.0
    %336 = vmatpush1.msra.mxu0 0.0
    %337 = vmatprep.subr.mxu0 0.0
    %338 = vmatpush1.msra.mxu0 0.0
    %339 = vmatprep.subr.mxu0 0.0
    %340 = vmatpush1.msra.mxu0 0.0
    %341 = vmatprep.subr.mxu0 0.0
    %342 = vmatpush1.msra.mxu0 0.0
    %343 = vmatprep.subr.mxu0 0.0
    %344 = vmatpush1.msra.mxu0 0.0
    %345 = vmatprep.subr.mxu0 0.0
    %346 = vmatpush1.msra.mxu0 0.0
    %347 = vmatprep.subr.mxu0 0.0
    %348 = vmatpush1.msra.mxu0 0.0
    %349 = vmatprep.subr.mxu0 0.0
    %350 = vmatpush1.msra.mxu0 0.0
    %351 = vmatprep.subr.mxu0 0.0
    %352 = vmatpush1.msra.mxu0 0.0
    %353 = vmatprep.subr.mxu0 0.0
    %354 = vmatpush1.msra.mxu0 0.0
    %355 = vmatprep.subr.mxu0 0.0
    %356 = vmatpush1.msra.mxu0 0.0
    %357 = vmatprep.subr.mxu0 0.0
    %358 = vmatpush1.msra.mxu0 0.0
    %359 = vmatprep.mubr.f32.mxu0 0.0
    %360 = vmatmul.mubr.f32.gmra.mrb[0].mxu0 %v218
    %v361 = vpop.f32.mrb[0].mxu0
    %v362 = vadd.f32 %v294, %v361
    %v363 = vpop.f32.mrb[0].mxu0
    %364 = vdwg.mxu0
    %v365 = vmul.f32 %v362, 1.442695
    %v366 = vpow.pop %v365
    %v367 = vmul.f32 %v366, %v43
    %v368 = vadd.f32 %v287, %v367
    %v369 = vmul.f32 %v287, 100.0
    %v370 = vmul.f32 %v369, %v287
    %v371 = vmul.f32 %v366, %v366
    %v372 = vmul.f32 %v371, 100.0
    %v373 = vadd.f32 %v370, %v372
    %v374 = vmul.f32 %v362, 2.0
    %v375 = vsub.f32 %v373, %v374
    %v376 = vadd.f32 %v375, -4.6051702
    %vm377 = vcmask 64512
    %v378 = vsel %vm377, %v376, 0.0
    %379 = vadd.xlane.f32.xlu0 %v378
    %v380 = vpop.xlane.xlu0 %379
    %v381 = vrot.slane %v380, 4
    %v382 = vadd.f32 %v380, %v381
    %v383 = vrot.slane %v382, 2
    %v384 = vadd.f32 %v382, %v383
    %v385 = vrot.slane %v384, 1
    %v386 = vadd.f32 %v384, %v385
    %s387 = vtos %v386
    %v388 = vrcp.pop 64.0
    %s389 = vtos %v388
    %s390 = smul.f32 %s387, %s389
    %s391 = ssub.f32 %s390, 8.0
    %s392 = smul.f32 %s391, 0.5
    %s393 = scalar_lea.smem [#allocation9], 0
    %394 = sst [smem:[%s393]] %s392
    %v395 = vld [vmem:[#allocation6 + $0x20] sm:$0xff]
    %v396 = vld [vmem:[#allocation6 + $0x28] sm:$0xff]
    %v398 = vsel %vm377, %v368, 0
    %400 = vmatprep.subr.mxu0 0.0
    %401 = vmatpush1.msra.mxu0 %v396
    %402 = vmatprep.subr.mxu0 0.0
    %403 = vmatpush1.msra.mxu0 0.0
    %404 = vmatprep.subr.mxu0 0.0
    %405 = vmatpush1.msra.mxu0 0.0
    %406 = vmatprep.subr.mxu0 0.0
    %407 = vmatpush1.msra.mxu0 0.0
    %408 = vmatprep.subr.mxu0 0.0
    %409 = vmatpush1.msra.mxu0 0.0
    %410 = vmatprep.subr.mxu0 0.0
    %411 = vmatpush1.msra.mxu0 0.0
    %412 = vmatprep.subr.mxu0 0.0
    %413 = vmatpush1.msra.mxu0 0.0
    %414 = vmatprep.subr.mxu0 0.0
    %415 = vmatpush1.msra.mxu0 0.0
    %416 = vmatprep.subr.mxu0 0.0
    %417 = vmatpush1.msra.mxu0 0.0
    %418 = vmatprep.subr.mxu0 0.0
    %419 = vmatpush1.msra.mxu0 0.0
    %420 = vmatprep.subr.mxu0 0.0
    %421 = vmatpush1.msra.mxu0 0.0
    %422 = vmatprep.subr.mxu0 0.0
    %423 = vmatpush1.msra.mxu0 0.0
    %424 = vmatprep.subr.mxu0 0.0
    %425 = vmatpush1.msra.mxu0 0.0
    %426 = vmatprep.subr.mxu0 0.0
    %427 = vmatpush1.msra.mxu0 0.0
    %428 = vmatprep.subr.mxu0 0.0
    %429 = vmatpush1.msra.mxu0 0.0
    %430 = vmatprep.subr.mxu0 0.0
    %431 = vmatpush1.msra.mxu0 0.0
    %432 = vmatprep.subr.mxu0 0.0
    %433 = vmatpush1.msra.mxu0 0.0
    %434 = vmatprep.subr.mxu0 0.0
    %435 = vmatpush1.msra.mxu0 0.0
    %436 = vmatprep.subr.mxu0 0.0
    %437 = vmatpush1.msra.mxu0 0.0
    %438 = vmatprep.subr.mxu0 0.0
    %439 = vmatpush1.msra.mxu0 0.0
    %440 = vmatprep.subr.mxu0 0.0
    %441 = vmatpush1.msra.mxu0 0.0
    %442 = vmatprep.subr.mxu0 0.0
    %443 = vmatpush1.msra.mxu0 0.0
    %444 = vmatprep.subr.mxu0 0.0
    %445 = vmatpush1.msra.mxu0 0.0
    %446 = vmatprep.subr.mxu0 0.0
    %447 = vmatpush1.msra.mxu0 0.0
    %448 = vmatprep.subr.mxu0 0.0
    %449 = vmatpush1.msra.mxu0 0.0
    %450 = vmatprep.subr.mxu0 0.0
    %451 = vmatpush1.msra.mxu0 0.0
    %452 = vmatprep.subr.mxu0 0.0
    %453 = vmatpush1.msra.mxu0 0.0
    %454 = vmatprep.subr.mxu0 0.0
    %455 = vmatpush1.msra.mxu0 0.0
    %456 = vmatprep.subr.mxu0 0.0
    %457 = vmatpush1.msra.mxu0 0.0
    %458 = vmatprep.subr.mxu0 0.0
    %459 = vmatpush1.msra.mxu0 0.0
    %460 = vmatprep.subr.mxu0 0.0
    %461 = vmatpush1.msra.mxu0 0.0
    %462 = vmatprep.subr.mxu0 0.0
    %463 = vmatpush1.msra.mxu0 0.0
    %464 = vmatprep.mubr.f32.mxu0 0.0
    %465 = vmatmul.mubr.f32.gmra.mrb[0].mxu0 %v398
    %v466 = vpop.f32.mrb[0].mxu0
    %v467 = vadd.f32 0.0, %v466
    %v468 = vpop.f32.mrb[0].mxu0
    %469 = vdwg.mxu0
    %v471 = vsel %vm377, %v42, 0
    %473 = vmatprep.subr.mxu0 0.0
    %474 = vmatpush1.msra.mxu0 %v395
    %475 = vmatprep.subr.mxu0 0.0
    %476 = vmatpush1.msra.mxu0 0.0
    %477 = vmatprep.subr.mxu0 0.0
    %478 = vmatpush1.msra.mxu0 0.0
    %479 = vmatprep.subr.mxu0 0.0
    %480 = vmatpush1.msra.mxu0 0.0
    %481 = vmatprep.subr.mxu0 0.0
    %482 = vmatpush1.msra.mxu0 0.0
    %483 = vmatprep.subr.mxu0 0.0
    %484 = vmatpush1.msra.mxu0 0.0
    %485 = vmatprep.subr.mxu0 0.0
    %486 = vmatpush1.msra.mxu0 0.0
    %487 = vmatprep.subr.mxu0 0.0
    %488 = vmatpush1.msra.mxu0 0.0
    %489 = vmatprep.subr.mxu0 0.0
    %490 = vmatpush1.msra.mxu0 0.0
    %491 = vmatprep.subr.mxu0 0.0
    %492 = vmatpush1.msra.mxu0 0.0
    %493 = vmatprep.subr.mxu0 0.0
    %494 = vmatpush1.msra.mxu0 0.0
    %495 = vmatprep.subr.mxu0 0.0
    %496 = vmatpush1.msra.mxu0 0.0
    %497 = vmatprep.subr.mxu0 0.0
    %498 = vmatpush1.msra.mxu0 0.0
    %499 = vmatprep.subr.mxu0 0.0
    %500 = vmatpush1.msra.mxu0 0.0
    %501 = vmatprep.subr.mxu0 0.0
    %502 = vmatpush1.msra.mxu0 0.0
    %503 = vmatprep.subr.mxu0 0.0
    %504 = vmatpush1.msra.mxu0 0.0
    %505 = vmatprep.subr.mxu0 0.0
    %506 = vmatpush1.msra.mxu0 0.0
    %507 = vmatprep.subr.mxu0 0.0
    %508 = vmatpush1.msra.mxu0 0.0
    %509 = vmatprep.subr.mxu0 0.0
    %510 = vmatpush1.msra.mxu0 0.0
    %511 = vmatprep.subr.mxu0 0.0
    %512 = vmatpush1.msra.mxu0 0.0
    %513 = vmatprep.subr.mxu0 0.0
    %514 = vmatpush1.msra.mxu0 0.0
    %515 = vmatprep.subr.mxu0 0.0
    %516 = vmatpush1.msra.mxu0 0.0
    %517 = vmatprep.subr.mxu0 0.0
    %518 = vmatpush1.msra.mxu0 0.0
    %519 = vmatprep.subr.mxu0 0.0
    %520 = vmatpush1.msra.mxu0 0.0
    %521 = vmatprep.subr.mxu0 0.0
    %522 = vmatpush1.msra.mxu0 0.0
    %523 = vmatprep.subr.mxu0 0.0
    %524 = vmatpush1.msra.mxu0 0.0
    %525 = vmatprep.subr.mxu0 0.0
    %526 = vmatpush1.msra.mxu0 0.0
    %527 = vmatprep.subr.mxu0 0.0
    %528 = vmatpush1.msra.mxu0 0.0
    %529 = vmatprep.subr.mxu0 0.0
    %530 = vmatpush1.msra.mxu0 0.0
    %531 = vmatprep.subr.mxu0 0.0
    %532 = vmatpush1.msra.mxu0 0.0
    %533 = vmatprep.subr.mxu0 0.0
    %534 = vmatpush1.msra.mxu0 0.0
    %535 = vmatprep.subr.mxu0 0.0
    %536 = vmatpush1.msra.mxu0 0.0
    %537 = vmatprep.mubr.f32.mxu0 0.0
    %538 = vmatmul.mubr.f32.gmra.mrb[0].mxu0 %v471
    %v539 = vpop.f32.mrb[0].mxu0
    %v540 = vadd.f32 %v467, %v539
    %v541 = vpop.f32.mrb[0].mxu0
    %542 = vdwg.mxu0
    %v543 = vld [vmem:[#allocation6 + $0x120] ss:$0 sm:$0xff]
    %v544 = vadd.f32 %v540, %v543
    %vm545 = vcmp.gt.f32.partialorder %v544, 0.0
    %v546 = vmin.f32 %v544, 0.0
    %v547 = vmul.f32 %v546, 1.442695
    %v548 = vpow.pop %v547
    %v549 = vsub.f32 %v548, 1.0
    %v550 = vsel %vm545, %v544, %v549
    %v551 = vld [vmem:[#allocation6 + $0x30] sm:$0xff]
    %v552 = vld [vmem:[#allocation6 + $0x70] sm:$0xff]
    %v553 = vld [vmem:[#allocation6 + $0xb0] sm:$0xff]
    %v554 = vld [vmem:[#allocation6 + $0xf0] sm:$0xff]
    %v555 = vld [vmem:[#allocation6 + $0x130] ss:$0 sm:$0xff]
    %v557 = vsel %vm132, %v550, 0
    %559 = vmatprep.subr.mxu0 0.0
    %560 = vmatpush1.msra.mxu0 %v551
    %561 = vmatprep.subr.mxu0 0.0
    %562 = vmatpush1.msra.mxu0 %v552
    %563 = vmatprep.subr.mxu0 0.0
    %564 = vmatpush1.msra.mxu0 %v553
    %565 = vmatprep.subr.mxu0 0.0
    %566 = vmatpush1.msra.mxu0 %v554
    %567 = vmatprep.subr.mxu0 0.0
    %568 = vmatpush1.msra.mxu0 0.0
    %569 = vmatprep.subr.mxu0 0.0
    %570 = vmatpush1.msra.mxu0 0.0
    %571 = vmatprep.subr.mxu0 0.0
    %572 = vmatpush1.msra.mxu0 0.0
    %573 = vmatprep.subr.mxu0 0.0
    %574 = vmatpush1.msra.mxu0 0.0
    %575 = vmatprep.subr.mxu0 0.0
    %576 = vmatpush1.msra.mxu0 0.0
    %577 = vmatprep.subr.mxu0 0.0
    %578 = vmatpush1.msra.mxu0 0.0
    %579 = vmatprep.subr.mxu0 0.0
    %580 = vmatpush1.msra.mxu0 0.0
    %581 = vmatprep.subr.mxu0 0.0
    %582 = vmatpush1.msra.mxu0 0.0
    %583 = vmatprep.subr.mxu0 0.0
    %584 = vmatpush1.msra.mxu0 0.0
    %585 = vmatprep.subr.mxu0 0.0
    %586 = vmatpush1.msra.mxu0 0.0
    %587 = vmatprep.subr.mxu0 0.0
    %588 = vmatpush1.msra.mxu0 0.0
    %589 = vmatprep.subr.mxu0 0.0
    %590 = vmatpush1.msra.mxu0 0.0
    %591 = vmatprep.subr.mxu0 0.0
    %592 = vmatpush1.msra.mxu0 0.0
    %593 = vmatprep.subr.mxu0 0.0
    %594 = vmatpush1.msra.mxu0 0.0
    %595 = vmatprep.subr.mxu0 0.0
    %596 = vmatpush1.msra.mxu0 0.0
    %597 = vmatprep.subr.mxu0 0.0
    %598 = vmatpush1.msra.mxu0 0.0
    %599 = vmatprep.subr.mxu0 0.0
    %600 = vmatpush1.msra.mxu0 0.0
    %601 = vmatprep.subr.mxu0 0.0
    %602 = vmatpush1.msra.mxu0 0.0
    %603 = vmatprep.subr.mxu0 0.0
    %604 = vmatpush1.msra.mxu0 0.0
    %605 = vmatprep.subr.mxu0 0.0
    %606 = vmatpush1.msra.mxu0 0.0
    %607 = vmatprep.subr.mxu0 0.0
    %608 = vmatpush1.msra.mxu0 0.0
    %609 = vmatprep.subr.mxu0 0.0
    %610 = vmatpush1.msra.mxu0 0.0
    %611 = vmatprep.subr.mxu0 0.0
    %612 = vmatpush1.msra.mxu0 0.0
    %613 = vmatprep.subr.mxu0 0.0
    %614 = vmatpush1.msra.mxu0 0.0
    %615 = vmatprep.subr.mxu0 0.0
    %616 = vmatpush1.msra.mxu0 0.0
    %617 = vmatprep.subr.mxu0 0.0
    %618 = vmatpush1.msra.mxu0 0.0
    %619 = vmatprep.subr.mxu0 0.0
    %620 = vmatpush1.msra.mxu0 0.0
    %621 = vmatprep.subr.mxu0 0.0
    %622 = vmatpush1.msra.mxu0 0.0
    %623 = vmatprep.mubr.f32.mxu0 0.0
    %624 = vmatmul.mubr.f32.gmra.mrb[0].mxu0 %v557
    %v625 = vpop.f32.mrb[0].mxu0
    %v626 = vadd.f32 %v555, %v625
    %v627 = vpop.f32.mrb[0].mxu0
    %628 = vdwg.mxu0
    %vm629 = vcmp.gt.f32.partialorder %v626, 0.0
    %v630 = vmin.f32 %v626, 0.0
    %v631 = vmul.f32 %v630, 1.442695
    %v632 = vpow.pop %v631
    %v633 = vsub.f32 %v632, 1.0
    %v634 = vsel %vm629, %v626, %v633
    %v635 = vld [vmem:[#allocation6 + $0x38] sm:$0xff]
    %v636 = vld [vmem:[#allocation6 + $0x78] sm:$0xff]
    %v637 = vld [vmem:[#allocation6 + $0xb8] sm:$0xff]
    %v638 = vld [vmem:[#allocation6 + $0xf8] sm:$0xff]
    %v639 = vld [vmem:[#allocation6 + $0x138] ss:$0 sm:$0xff]
    %v641 = vsel %vm132, %v634, 0
    %643 = vmatprep.subr.mxu0 0.0
    %644 = vmatpush1.msra.mxu0 %v635
    %645 = vmatprep.subr.mxu0 0.0
    %646 = vmatpush1.msra.mxu0 %v636
    %647 = vmatprep.subr.mxu0 0.0
    %648 = vmatpush1.msra.mxu0 %v637
    %649 = vmatprep.subr.mxu0 0.0
    %650 = vmatpush1.msra.mxu0 %v638
    %651 = vmatprep.subr.mxu0 0.0
    %652 = vmatpush1.msra.mxu0 0.0
    %653 = vmatprep.subr.mxu0 0.0
    %654 = vmatpush1.msra.mxu0 0.0
    %655 = vmatprep.subr.mxu0 0.0
    %656 = vmatpush1.msra.mxu0 0.0
    %657 = vmatprep.subr.mxu0 0.0
    %658 = vmatpush1.msra.mxu0 0.0
    %659 = vmatprep.subr.mxu0 0.0
    %660 = vmatpush1.msra.mxu0 0.0
    %661 = vmatprep.subr.mxu0 0.0
    %662 = vmatpush1.msra.mxu0 0.0
    %663 = vmatprep.subr.mxu0 0.0
    %664 = vmatpush1.msra.mxu0 0.0
    %665 = vmatprep.subr.mxu0 0.0
    %666 = vmatpush1.msra.mxu0 0.0
    %667 = vmatprep.subr.mxu0 0.0
    %668 = vmatpush1.msra.mxu0 0.0
    %669 = vmatprep.subr.mxu0 0.0
    %670 = vmatpush1.msra.mxu0 0.0
    %671 = vmatprep.subr.mxu0 0.0
    %672 = vmatpush1.msra.mxu0 0.0
    %673 = vmatprep.subr.mxu0 0.0
    %674 = vmatpush1.msra.mxu0 0.0
    %675 = vmatprep.subr.mxu0 0.0
    %676 = vmatpush1.msra.mxu0 0.0
    %677 = vmatprep.subr.mxu0 0.0
    %678 = vmatpush1.msra.mxu0 0.0
    %679 = vmatprep.subr.mxu0 0.0
    %680 = vmatpush1.msra.mxu0 0.0
    %681 = vmatprep.subr.mxu0 0.0
    %682 = vmatpush1.msra.mxu0 0.0
    %683 = vmatprep.subr.mxu0 0.0
    %684 = vmatpush1.msra.mxu0 0.0
    %685 = vmatprep.subr.mxu0 0.0
    %686 = vmatpush1.msra.mxu0 0.0
    %687 = vmatprep.subr.mxu0 0.0
    %688 = vmatpush1.msra.mxu0 0.0
    %689 = vmatprep.subr.mxu0 0.0
    %690 = vmatpush1.msra.mxu0 0.0
    %691 = vmatprep.subr.mxu0 0.0
    %692 = vmatpush1.msra.mxu0 0.0
    %693 = vmatprep.subr.mxu0 0.0
    %694 = vmatpush1.msra.mxu0 0.0
    %695 = vmatprep.subr.mxu0 0.0
    %696 = vmatpush1.msra.mxu0 0.0
    %697 = vmatprep.subr.mxu0 0.0
    %698 = vmatpush1.msra.mxu0 0.0
    %699 = vmatprep.subr.mxu0 0.0
    %700 = vmatpush1.msra.mxu0 0.0
    %701 = vmatprep.subr.mxu0 0.0
    %702 = vmatpush1.msra.mxu0 0.0
    %703 = vmatprep.subr.mxu0 0.0
    %704 = vmatpush1.msra.mxu0 0.0
    %705 = vmatprep.subr.mxu0 0.0
    %706 = vmatpush1.msra.mxu0 0.0
    %707 = vmatprep.mubr.f32.mxu0 0.0
    %708 = vmatmul.mubr.f32.gmra.mrb[0].mxu0 %v641
    %v709 = vpop.f32.mrb[0].mxu0
    %v710 = vadd.f32 %v639, %v709
    %v711 = vpop.f32.mrb[0].mxu0
    %712 = vdwg.mxu0
    %713 = vst [vmem:[#allocation8] sm:$0xff] %v710
    // Predicated region
    $region18: #{tpu_custom_call.1} parent=1 // pred_check
      _
    $region19: #{tpu_custom_call.1} parent=1 // pred_check_branch
      %715 = sbr.rel (0) target = $region21
    $region20: #{tpu_custom_call.1} parent=1 // pred_region
      %s717 = ssub.s32 128, 128
      %718 = vsyncadd [#allocation4], %s717
      %s720 = sshll.u32 [#allocation8], 4
      %s721 = int_to_ptr.vmem [resolvable:$true] %s720
      %723 = dma.vmem_to_hbm [thread:$0]  %s721, 128, %s2, [#allocation4]
    $region21: #{tpu_custom_call.1} parent=1 // pred_fallthru
      _
    // Predicated region
    $region22: #{tpu_custom_call.1} parent=1 // pred_check
      _
    $region23: #{tpu_custom_call.1} parent=1 // pred_check_branch
      %725 = sbr.rel (0) target = $region25
    $region24: #{tpu_custom_call.1} parent=1 // pred_region
      %s727 = ssub.s32 16, 16
      %728 = vsyncadd [#allocation5], %s727
      %731 = dma.smem_to_hbm [#allocation9], 16, %s3, [#allocation5]
    $region25: #{tpu_custom_call.1} parent=1 // pred_fallthru
      _
    // Predicated region
    $region26: #{tpu_custom_call.1} parent=1 // pred_check
      _
    $region27: #{tpu_custom_call.1} parent=1 // pred_check_branch
      %733 = sbr.rel (0) target = $region29
    $region28: #{tpu_custom_call.1} parent=1 // pred_region
      %734 = dma.done [#allocation4], 128
    $region29: #{tpu_custom_call.1} parent=1 // pred_fallthru
      _
    // Predicated region
    $region30: #{tpu_custom_call.1} parent=1 // pred_check
      _
    $region31: #{tpu_custom_call.1} parent=1 // pred_check_branch
      %736 = sbr.rel (0) target = $region33
    $region32: #{tpu_custom_call.1} parent=1 // pred_region
      %737 = dma.done [#allocation5], 16
    $region33: #{tpu_custom_call.1} parent=1 // pred_fallthru
      _
    %738 = sfence
    %739 = vsyncpa [#allocation3], 1
    %740 = vsyncpa [#allocation7], 1
    %741 = vsyncpa [#allocation4], 1
    %742 = vsyncpa [#allocation5], 1

</llo_original>
